<compile_context>
chip_gen: v7x
topology: tpu7x:2x2x1
jax: 0.10.0
libtpu: 0.0.40
codegen_flags: <defaults>
</compile_context>

<pallas_src>
import jax
import jax.numpy as jnp
from jax import lax
from jax.experimental import pallas as pl
from jax.experimental.pallas import tpu as pltpu


# ---------------------------------------------------------------------------
# In-kernel helpers
# ---------------------------------------------------------------------------

def _circ_conv3(y, w_m, w_c, w_p, d):
    """Circular Conv1d(k=3, dilation=d, circular pad=d) along axis 0 of y.

    y: (C, 1) f32.  out[i] = w_m*y[(i-d)%C] + w_c*y[i] + w_p*y[(i+d)%C],
    matching PyTorch Conv1d(1, 1, 3, padding=d, dilation=d,
    padding_mode='circular', bias=False) with weight [w_m, w_c, w_p].
    Rolls run on the XLU, FMAs on the VPU -- no MXU, no CxC circulant.
    """
    C = y.shape[0]
    y_m = pltpu.roll(y, shift=d % C, axis=0)      # y[(i - d) % C]
    y_p = pltpu.roll(y, shift=(-d) % C, axis=0)   # y[(i + d) % C]
    return w_m * y_m + w_c * y + w_p * y_p


def _attention_from_pooled(y, p_ref):
    """(C,1) pooled mean -> (C,1) sigmoid gate: conv(d=1)+SiLU, conv(d=2)."""
    y1 = _circ_conv3(y, p_ref[0], p_ref[1], p_ref[2], 1)
    y1 = y1 * jax.nn.sigmoid(y1)                  # SiLU after first conv
    y2 = _circ_conv3(y1, p_ref[3], p_ref[4], p_ref[5], 2)
    return jax.nn.sigmoid(y2)                     # Identity act, then sigmoid


# ---------------------------------------------------------------------------
# Kernels
# ---------------------------------------------------------------------------

def _wca_fused_kernel(p_ref, x_ref, o_ref):
    """Single pass per batch: pool + conv stack + gate, slab resident in VMEM."""
    x = x_ref[...]                                                # (C, HW) native dtype
    y = jnp.sum(x.astype(jnp.float32), axis=-1, keepdims=True) * p_ref[6]
    att = _attention_from_pooled(y, p_ref)                        # (C, 1) f32
    o_ref[...] = x * att.astype(o_ref.dtype)                      # fused vmul -> store


def _make_pool_kernel(hw, tile, n_inner, masked):
    """Phase 1: per-channel partial sums over one parallel HW shard."""
    def kernel(x_ref, sum_ref):
        h = pl.program_id(1)
        t = pl.program_id(2)

        @pl.when(t == 0)
        def _init():
            sum_ref[...] = jnp.zeros_like(sum_ref)

        x = x_ref[...].astype(jnp.float32)                        # (C, tile)
        if masked:
            # Partial / clamped tiles: zero out lanes past the true HW extent
            # (OOB block reads are NOT guaranteed zero on TPU).
            lane = lax.broadcasted_iota(jnp.int32, x.shape, 1)
            start = (h * n_inner + t) * tile
            x = jnp.where(start + lane < hw, x, 0.0)
        sum_ref[...] += jnp.sum(x, axis=-1, keepdims=True)
    return kernel


def _wca_gate_kernel(p_ref, sums_ref, x_ref, o_ref):
    """Phase 2: combine partial sums -> attention -> gate one x tile.

    The attention recompute is O(C) VPU/XLU/EUP work per step, fully hidden
    under streaming the C*tile x block from HBM; OOB writes of the partial
    last tile are dropped by Pallas, so no mask is needed here.
    """
    y = jnp.sum(sums_ref[...], axis=0) * p_ref[6]                 # (C, 1) mean (true 1/HW)
    att = _attention_from_pooled(y, p_ref)                        # (C, 1) f32
    o_ref[...] = x_ref[...] * att.astype(o_ref.dtype)


# ---------------------------------------------------------------------------
# Wrapper
# ---------------------------------------------------------------------------

def _tpu_vmem_capacity_bytes():
    try:
        info = pltpu.get_tpu_info()
        cap = getattr(info, "vmem_capacity_bytes", None)
        if cap:
            return int(cap)
    except Exception:
        pass
    return 64 * 2**20            # conservative default (v7x per-core VMEM)


def wca_layer_pallas(x, w1, w2, *, tile=None, force_tiled=False):
    """x: (B, C, H, W).  w1, w2: (3,) Conv1d weights (out=1, in=1, k=3)."""
    B, C, H, W = x.shape
    HW = H * W
    itemsize = x.dtype.itemsize
    xr = x.reshape(B, C, HW)                       # metadata-only reshape

    # Conv taps + 1/HW normalization as SMEM scalars (no CxC matrices at all).
    params = jnp.concatenate([
        jnp.asarray(w1, jnp.float32).reshape(3),
        jnp.asarray(w2, jnp.float32).reshape(3),
        jnp.asarray([1.0 / HW], jnp.float32),
    ])

    vmem_cap = _tpu_vmem_capacity_bytes()
    scoped_cap = (3 * vmem_cap) // 4               # headroom: v6e ~96 MiB, v7x ~48 MiB

    slab_bytes = C * HW * itemsize
    # double-buffered in + out + f32 reduce temp must fit scoped VMEM
    fused_need = 4 * slab_bytes + C * HW * 4 + (1 << 20)

    if fused_need <= scoped_cap and not force_tiled:
        # ---- fused single-pass path: one (C, HW) slab per batch, x read once ----
        out = pl.pallas_call(
            _wca_fused_kernel,
            out_shape=jax.ShapeDtypeStruct((B, C, HW), x.dtype),
            grid=(B,),
            in_specs=[
                pl.BlockSpec(memory_space=pltpu.MemorySpace.SMEM),
                pl.BlockSpec((pl.Squeezed(), C, HW), lambda b: (b, 0, 0)),
            ],
            out_specs=pl.BlockSpec((pl.Squeezed(), C, HW), lambda b: (b, 0, 0)),
            input_output_aliases={1: 0},           # reuse x's HBM buffer when dead
            compiler_params=pltpu.CompilerParams(
                dimension_semantics=("parallel",),
                vmem_limit_bytes=int(scoped_cap),
            ),
            cost_estimate=pl.CostEstimate(
                flops=2 * B * C * HW,
                transcendentals=3 * B * C,
                bytes_accessed=2 * B * C * HW * itemsize,
            ),
        )(params, xr)
        return out.reshape(B, C, H, W)

    # ---- tiled two-phase path: partial-sum pool pass + parallel gating pass ----
    # Byte-targeted tiles (not lane-capped): ~6 MiB/step on v7x, ~3 MiB elsewhere.
    target_bytes = 6 * 2**20 if vmem_cap <= 64 * 2**20 else 3 * 2**20
    if tile is None:
        t = target_bytes // max(1, C * itemsize)
        tile = max(128, (t // 128) * 128)
    tile = max(128, (int(tile) // 128) * 128)      # lane-dense multiple of 128
    tile = min(tile, pl.cdiv(HW, 128) * 128)       # never larger than needed
    n_blocks = pl.cdiv(HW, tile)
    block_bytes = C * tile * itemsize
    # TODO(synk): for tiny C*itemsize (C <= 64) block multiple batches per step;
    # with byte-targeted tiles the tiled path only triggers on large slabs, so
    # single-batch blocks already hit the 2-8 MiB DMA target.

    # 2-way parallel split of the HW-tile axis so both v7x TCs stream phase 1
    # even at B == 1.  Odd n_blocks: the extra block index is clamped to the
    # last valid block and its contribution is masked to zero in-kernel.
    split = 2 if n_blocks >= 2 else 1
    n_inner = pl.cdiv(n_blocks, split)
    masked = (split * n_inner * tile) != HW

    sums = pl.pallas_call(
        _make_pool_kernel(HW, tile, n_inner, masked),
        out_shape=jax.ShapeDtypeStruct((B, split, C, 1), jnp.float32),
        grid=(B, split, n_inner),
        in_specs=[
            pl.BlockSpec(
                (pl.Squeezed(), C, tile),
                lambda b, h, t: (b, 0, jnp.minimum(h * n_inner + t, n_blocks - 1)),
            ),
        ],
        out_specs=pl.BlockSpec(
            (pl.Squeezed(), pl.Squeezed(), C, 1),
            lambda b, h, t: (b, h, 0, 0),
        ),
        compiler_params=pltpu.CompilerParams(
            dimension_semantics=("parallel", "parallel", "arbitrary"),
            vmem_limit_bytes=int(min(scoped_cap, 4 * block_bytes + (4 << 20))),
        ),
        cost_estimate=pl.CostEstimate(
            flops=B * C * HW,
            transcendentals=0,
            bytes_accessed=B * C * HW * itemsize + B * split * C * 4,
        ),
    )(xr)

    out = pl.pallas_call(
        _wca_gate_kernel,
        out_shape=jax.ShapeDtypeStruct((B, C, HW), x.dtype),
        grid=(B, n_blocks),
        in_specs=[
            pl.BlockSpec(memory_space=pltpu.MemorySpace.SMEM),
            pl.BlockSpec((pl.Squeezed(), split, C, 1), lambda b, t: (b, 0, 0, 0)),
            pl.BlockSpec((pl.Squeezed(), C, tile), lambda b, t: (b, 0, t)),
        ],
        out_specs=pl.BlockSpec((pl.Squeezed(), C, tile), lambda b, t: (b, 0, t)),
        input_output_aliases={2: 0},               # reuse x's HBM buffer when dead
        compiler_params=pltpu.CompilerParams(
            dimension_semantics=("parallel", "parallel"),
            vmem_limit_bytes=int(min(scoped_cap, 5 * block_bytes + (4 << 20))),
        ),
        cost_estimate=pl.CostEstimate(
            flops=2 * B * C * HW,
            transcendentals=3 * B * C * n_blocks,
            bytes_accessed=2 * B * C * HW * itemsize + B * split * C * 4,
        ),
    )(params, sums, xr)
    return out.reshape(B, C, H, W)


# ---------------------------------------------------------------------------
# Pure-JAX reference (independent of the kernel's roll layout)
# ---------------------------------------------------------------------------

def wca_layer_ref(x, w1, w2):
    y = jnp.mean(x, axis=(2, 3))                                  # (B, C)

    def circ_conv(y, w, d):
        return (w[0] * jnp.roll(y, d, axis=1)
                + w[1] * y
                + w[2] * jnp.roll(y, -d, axis=1))

    y1 = circ_conv(y, w1, 1)
    y1 = y1 * jax.nn.sigmoid(y1)          # SiLU after first conv
    y2 = circ_conv(y1, w2, 2)             # Identity after last conv
    att = jax.nn.sigmoid(y2)
    return x * att[:, :, None, None]


if __name__ == "__main__":
    key = jax.random.PRNGKey(0)
    kx, k1, k2, kx2, kx3 = jax.random.split(key, 5)

    # Deterministic Conv1d weights, shape (out=1, in=1, k=3) flattened to (3,).
    w1 = jax.random.normal(k1, (3,), dtype=jnp.float32) * 0.5
    w2 = jax.random.normal(k2, (3,), dtype=jnp.float32) * 0.5

    # --- Test 1: fused single-pass path, 128-aligned HW ---
    B, C, H, W = 2, 8, 16, 16
    x = jax.random.normal(kx, (B, C, H, W), dtype=jnp.float32)
    ref = wca_layer_ref(x, w1, w2)                      # reference first (x never reused after kernel)
    out = jax.block_until_ready(wca_layer_pallas(x, w1, w2))
    assert out.shape == ref.shape == (B, C, H, W)
    if not jnp.allclose(out, ref, atol=1e-4, rtol=1e-4):
        raise AssertionError("fused-path (aligned HW) Pallas kernel does not match reference")

    # --- Test 2: fused path with ragged HW (full-extent block, no pad/slice) ---
    B3, C3, H3, W3 = 2, 8, 10, 10                       # HW = 100, not a multiple of 128
    x3 = jax.random.normal(kx3, (B3, C3, H3, W3), dtype=jnp.float32)
    ref3 = wca_layer_ref(x3, w1, w2)
    out3 = jax.block_until_ready(wca_layer_pallas(x3, w1, w2))
    if not jnp.allclose(out3, ref3, atol=1e-4, rtol=1e-4):
        raise AssertionError("fused-path (ragged HW) Pallas kernel does not match reference")

    # --- Test 3: tiled two-pass path, ragged HW, odd tile count (exercises the
    #     in-kernel mask, the clamped index map, and the 2-way pool split) ---
    B2, C2, H2, W2 = 2, 16, 18, 18                      # HW = 324 -> 3 tiles of 128
    x2 = jax.random.normal(kx2, (B2, C2, H2, W2), dtype=jnp.float32)
    ref2 = wca_layer_ref(x2, w1, w2)
    out2 = jax.block_until_ready(
        wca_layer_pallas(x2, w1, w2, tile=128, force_tiled=True))
    assert out2.shape == ref2.shape == (B2, C2, H2, W2)
    if not jnp.allclose(out2, ref2, atol=1e-4, rtol=1e-4):
        raise AssertionError("tiled-path Pallas kernel does not match reference")

    print("KERNEL_OK")
</pallas_src>

<mosaic_0001>
module attributes {stable_mosaic.version = 11 : i64} {
  func.func @_wca_fused_kernel(%arg0: i32, %arg1: memref<7xf32, #tpu.memory_space<smem>>, %arg2: memref<1x8x256xf32, #tpu.memory_space<vmem>>, %arg3: memref<1x8x256xf32, #tpu.memory_space<vmem>>) attributes {dimension_semantics = [#tpu.dimension_semantics<parallel>], iteration_bounds = array<i64: 2>, scalar_prefetch = 0 : i64, scratch_operands = 0 : i64, tpu.core_type = #tpu.core_type<tc>, window_params = [{transform_indices = @transform_0, window_bounds = array<i64: 7>}, {transform_indices = @transform_1, window_bounds = array<i64: 1, 8, 256>}, {transform_indices = @transform_2, window_bounds = array<i64: 1, 8, 256>}]} {
    %c0 = arith.constant 0 : index
    %c0_0 = arith.constant 0 : index
    %c0_1 = arith.constant 0 : index
    %0 = vector.load %arg2[%c0, %c0_0, %c0_1] : memref<1x8x256xf32, #tpu.memory_space<vmem>>, vector<1x8x256xf32>
    %1 = vector.shape_cast %0 : vector<1x8x256xf32> to vector<8x256xf32>
    %cst = arith.constant dense<0.000000e+00> : vector<8xf32>
    %2 = vector.multi_reduction <add>, %1, %cst [1] : vector<8x256xf32> to vector<8xf32>
    %3 = vector.shape_cast %2 : vector<8xf32> to vector<8x1xf32>
    %c6 = arith.constant 6 : index
    %4 = memref.load %arg1[%c6] : memref<7xf32, #tpu.memory_space<smem>>
    %5 = vector.broadcast %4 : f32 to vector<8x1xf32>
    %6 = arith.mulf %3, %5 : vector<8x1xf32>
    %c0_2 = arith.constant 0 : index
    %7 = memref.load %arg1[%c0_2] : memref<7xf32, #tpu.memory_space<smem>>
    %c1 = arith.constant 1 : index
    %8 = memref.load %arg1[%c1] : memref<7xf32, #tpu.memory_space<smem>>
    %c2 = arith.constant 2 : index
    %9 = memref.load %arg1[%c2] : memref<7xf32, #tpu.memory_space<smem>>
    %c1_i32 = arith.constant 1 : i32
    %10 = tpu.dynamic_rotate %6 by %c1_i32 dim 0 : vector<8x1xf32>, i32 -> vector<8x1xf32>
    %c7_i32 = arith.constant 7 : i32
    %11 = tpu.dynamic_rotate %6 by %c7_i32 dim 0 : vector<8x1xf32>, i32 -> vector<8x1xf32>
    %12 = vector.broadcast %7 : f32 to vector<8x1xf32>
    %13 = arith.mulf %12, %10 : vector<8x1xf32>
    %14 = vector.broadcast %8 : f32 to vector<8x1xf32>
    %15 = arith.mulf %14, %6 : vector<8x1xf32>
    %16 = arith.addf %13, %15 : vector<8x1xf32>
    %17 = vector.broadcast %9 : f32 to vector<8x1xf32>
    %18 = arith.mulf %17, %11 : vector<8x1xf32>
    %19 = arith.addf %16, %18 : vector<8x1xf32>
    %20 = arith.negf %19 : vector<8x1xf32>
    %21 = math.exp %20 : vector<8x1xf32>
    %cst_3 = arith.constant 1.000000e+00 : f32
    %22 = vector.broadcast %cst_3 : f32 to vector<8x1xf32>
    %23 = arith.addf %22, %21 : vector<8x1xf32>
    %24 = arith.divf %22, %23 : vector<8x1xf32>
    %25 = arith.mulf %19, %24 : vector<8x1xf32>
    %c3 = arith.constant 3 : index
    %26 = memref.load %arg1[%c3] : memref<7xf32, #tpu.memory_space<smem>>
    %c4 = arith.constant 4 : index
    %27 = memref.load %arg1[%c4] : memref<7xf32, #tpu.memory_space<smem>>
    %c5 = arith.constant 5 : index
    %28 = memref.load %arg1[%c5] : memref<7xf32, #tpu.memory_space<smem>>
    %c2_i32 = arith.constant 2 : i32
    %29 = tpu.dynamic_rotate %25 by %c2_i32 dim 0 : vector<8x1xf32>, i32 -> vector<8x1xf32>
    %c6_i32 = arith.constant 6 : i32
    %30 = tpu.dynamic_rotate %25 by %c6_i32 dim 0 : vector<8x1xf32>, i32 -> vector<8x1xf32>
    %31 = vector.broadcast %26 : f32 to vector<8x1xf32>
    %32 = arith.mulf %31, %29 : vector<8x1xf32>
    %33 = vector.broadcast %27 : f32 to vector<8x1xf32>
    %34 = arith.mulf %33, %25 : vector<8x1xf32>
    %35 = arith.addf %32, %34 : vector<8x1xf32>
    %36 = vector.broadcast %28 : f32 to vector<8x1xf32>
    %37 = arith.mulf %36, %30 : vector<8x1xf32>
    %38 = arith.addf %35, %37 : vector<8x1xf32>
    %39 = arith.negf %38 : vector<8x1xf32>
    %40 = math.exp %39 : vector<8x1xf32>
    %cst_4 = arith.constant 1.000000e+00 : f32
    %41 = vector.broadcast %cst_4 : f32 to vector<8x1xf32>
    %42 = arith.addf %41, %40 : vector<8x1xf32>
    %43 = arith.divf %41, %42 : vector<8x1xf32>
    %44 = vector.broadcast %43 : vector<8x1xf32> to vector<8x256xf32>
    %45 = arith.mulf %1, %44 : vector<8x256xf32>
    %c0_5 = arith.constant 0 : index
    %c0_6 = arith.constant 0 : index
    %c0_7 = arith.constant 0 : index
    %46 = vector.load %arg3[%c0_5, %c0_6, %c0_7] : memref<1x8x256xf32, #tpu.memory_space<vmem>>, vector<1x8x256xf32>
    %47 = vector.shape_cast %46 : vector<1x8x256xf32> to vector<8x256xf32>
    %48 = vector.shape_cast %45 : vector<8x256xf32> to vector<1x8x256xf32>
    tpu.vector_store %arg3[%c0_5, %c0_6, %c0_7], %48 {strides = array<i32>} : memref<1x8x256xf32, #tpu.memory_space<vmem>>, vector<1x8x256xf32>,
    return
  }
  func.func @transform_0(%arg0: i32) -> i32 {
    %c0_i32 = arith.constant 0 : i32
    %c0_i32_0 = arith.constant 0 : i32
    return %c0_i32 : i32
  }
  func.func @transform_1(%arg0: i32) -> (i32, i32, i32) {
    %c0_i32 = arith.constant 0 : i32
    %c0_i32_0 = arith.constant 0 : i32
    %c0_i32_1 = arith.constant 0 : i32
    return %arg0, %c0_i32, %c0_i32_0 : i32, i32, i32
  }
  func.func @transform_2(%arg0: i32) -> (i32, i32, i32) {
    %c0_i32 = arith.constant 0 : i32
    %c0_i32_0 = arith.constant 0 : i32
    %c0_i32_1 = arith.constant 0 : i32
    return %arg0, %c0_i32, %c0_i32_0 : i32, i32, i32
  }
}

</mosaic_0001>

<llo_original>
// kernel: tpu_custom_call.1
$region0: #{tpu_custom_call.1}
  #allocation0 [shape = 'u32[]', space=smem, size = 0x4, offset = 0x4, fixed_abs, tag = 'smem constant byte address 0x4 - core index']
  #allocation1 [shape = 'u32[144,128]{1,0:T(1,128)}', space=vmem, size = 0x12000, scoped, tag = 'internal scratch']
  %s0 = inlined_call_operand.vmem [shape: f32[7], index: 0, kind: input, shape index: {}]
  %s1 = inlined_call_operand.hbm [shape: f32[2,8,256], index: 1, kind: input, shape index: {}, may-alias: {1,2}]
  %s2 = inlined_call_operand.hbm [shape: f32[2,8,256], index: 2, kind: output, shape index: {}, may-alias: {1,2}]
  %s3 = sld [smem:[#allocation0]]
  $region49: #{tpu_custom_call.1} parent=0
    _
  %s5 = ssub.s32 1, %s3
  %s6 = scalar_select 0, %s5, %s3
  $region1: #{tpu_custom_call.1} parent=0
    #allocation2 [shape = 'u8[512]{0}', space=smem, size = 0x200, scoped, tag = 'input window, operand 0, single buffered']
    #allocation3 [shape = 's32[2]{0}', space=sflag, size = 0x8, scoped, tag = 'scoped memory for tpu_custom_call.1']
    #allocation4 [shape = 's32[2]{0}', space=sflag, size = 0x8, scoped, tag = 'scoped memory for tpu_custom_call.1']
    #allocation5 [shape = 's32[2]{0}', space=sflag, size = 0x8, scoped, tag = 'scoped memory for tpu_custom_call.1']
    #allocation6 [shape = 'u8[16384]{0}', space=vmem, size = 0x4000, scoped, tag = 'input window, operand 1']
    #allocation7 [shape = 'u8[16384]{0}', space=vmem, size = 0x4000, scoped, tag = 'output window, operand 0']
    %7 = vsyncpa [#allocation5], 0
    %8 = vsyncpa [#allocation3], 0
    %s9 = scalar_lea.sflag [#allocation3], 1
    %10 = vsyncpa %s9, 0
    %11 = vsyncpa [#allocation4], 0
    %s12 = scalar_lea.sflag [#allocation4], 1
    %13 = vsyncpa %s12, 0
    loop: start=0, step=1, limit=4
    $region2: #{tpu_custom_call.1} parent=1 // loop_pre_header
      _
    $region3: #{tpu_custom_call.1} parent=1 // loop_header
      %s15 = sphi 0, %s19
      %p16 = scmp.ge.s32.totalorder %s15, 4
      %s23 = sphi 0, %s23
      %s25 = sphi 0, %s23
      %s26 = sphi 0, %s25
      %s40 = sphi 0, %s26
      %s46 = sphi 0, %s48
      %s49 = sphi 0, %s46
      %s50 = sphi 0, %s49
      %s66 = sphi 0, %s50
      %s72 = sphi 0, %s74
      %s75 = sphi 0, %s72
      %s76 = sphi 0, %s75
      %s92 = sphi 0, %s76
    $region4: #{tpu_custom_call.1} parent=1 // loop_header_branch
      %18 = sbr.rel (%p16) target = $region8
    $region5: #{tpu_custom_call.1} parent=1 // loop_body
      %s20 = ssub.s32 %s15, 1
      %s21 = ssub.s32 %s15, 2
      %s22 = sadd.s32 %s15, 1
      %s24 = sadd.s32 %s23, 1
      %p27 = scmp.eq.s32.totalorder %s15, 1
      %p28 = scmp.ne.s32.totalorder %s23, %s25
      %p29 = scmp.eq.s32.totalorder %s15, 0
      %p30 = por %p28, %p29
      %p31 = scmp.ne.s32.totalorder %s23, %s25
      %p32 = scmp.eq.s32.totalorder %s20, 1
      %p33 = por %p31, %p32
      %p34 = scmp.ne.s32.totalorder %s25, %s26
      %p35 = scmp.eq.s32.totalorder %s20, 0
      %p36 = por %p34, %p35
      %p37 = scmp.ne.s32.totalorder %s25, %s26
      %p38 = scmp.eq.s32.totalorder %s21, 1
      %p39 = por %p37, %p38
      %p41 = scmp.ne.s32.totalorder %s26, %s40
      %p42 = scmp.eq.s32.totalorder %s21, 0
      %p43 = por %p41, %p42
      %s44 = ssub.s32 %s15, %s22
      %p45 = scmp.eq.s32.totalorder %s44, 0
      %s47 = sadd.s32 %s46, 1
      %s48 = scalar_select %p45, %s46, %s47
      %p51 = pneg %p45
      %p52 = scmp.eq.s32.totalorder %s15, 1
      %p53 = por %p51, %p52
      %p54 = scmp.ne.s32.totalorder %s46, %s49
      %p55 = scmp.eq.s32.totalorder %s15, 0
      %p56 = por %p54, %p55
      %p57 = scmp.ne.s32.totalorder %s46, %s49
      %p58 = scmp.eq.s32.totalorder %s20, 1
      %p59 = por %p57, %p58
      %p60 = scmp.ne.s32.totalorder %s49, %s50
      %p61 = scmp.eq.s32.totalorder %s20, 0
      %p62 = por %p60, %p61
      %p63 = scmp.ne.s32.totalorder %s49, %s50
      %p64 = scmp.eq.s32.totalorder %s21, 1
      %p65 = por %p63, %p64
      %p67 = scmp.ne.s32.totalorder %s50, %s66
      %p68 = scmp.eq.s32.totalorder %s21, 0
      %p69 = por %p67, %p68
      %s70 = ssub.s32 %s15, %s22
      %p71 = scmp.eq.s32.totalorder %s70, 0
      %s73 = sadd.s32 %s72, 1
      %s74 = scalar_select %p71, %s72, %s73
      %p77 = pneg %p71
      %p78 = scmp.eq.s32.totalorder %s15, 1
      %p79 = por %p77, %p78
      %p80 = scmp.ne.s32.totalorder %s72, %s75
      %p81 = scmp.eq.s32.totalorder %s15, 0
      %p82 = por %p80, %p81
      %p83 = scmp.ne.s32.totalorder %s72, %s75
      %p84 = scmp.eq.s32.totalorder %s20, 1
      %p85 = por %p83, %p84
      %p86 = scmp.ne.s32.totalorder %s75, %s76
      %p87 = scmp.eq.s32.totalorder %s20, 0
      %p88 = por %p86, %p87
      %p89 = scmp.ne.s32.totalorder %s75, %s76
      %p90 = scmp.eq.s32.totalorder %s21, 1
      %p91 = por %p89, %p90
      %p93 = scmp.ne.s32.totalorder %s76, %s92
      %p94 = scmp.eq.s32.totalorder %s21, 0
      %p95 = por %p93, %p94
      %p96 = scmp.le.s32.totalorder 1, %s15
      %p97 = scmp.lt.s32.totalorder %s15, 3
      %p98 = pnand %p96, %p97
      %p99 = pneg %p98
      // Predicated region
      $region9: #{tpu_custom_call.1} parent=5 // pred_check
        _
      $region10: #{tpu_custom_call.1} parent=5 // pred_check_branch
        %101 = sbr.rel (%p98) target = $region12
      $region11: #{tpu_custom_call.1} parent=5 // pred_region
        %s102 = ssub.s32 %s15, 1
        // Predicated region
        $region13: #{tpu_custom_call.1} parent=11 // pred_check
          %p103 = pneg %p36
        $region14: #{tpu_custom_call.1} parent=11 // pred_check_branch
          %105 = sbr.rel (%p103) target = $region16
        $region15: #{tpu_custom_call.1} parent=11 // pred_region
          %s107 = ssub.s32 16, 16
          %108 = vsyncadd [#allocation5], %s107
          %s110 = sshll.u32 %s0, 4
          %s111 = int_to_ptr.vmem [resolvable:$true] %s110
          %113 = dma.vmem_to_smem %s111, 16, [#allocation2], [#allocation5]
        $region16: #{tpu_custom_call.1} parent=11 // pred_fallthru
          _
      $region12: #{tpu_custom_call.1} parent=5 // pred_fallthru
        _
      %p114 = scmp.lt.s32.totalorder %s15, 2
      // Predicated region
      $region17: #{tpu_custom_call.1} parent=5 // pred_check
        %p115 = pneg %p114
      $region18: #{tpu_custom_call.1} parent=5 // pred_check_branch
        %117 = sbr.rel (%p115) target = $region20
      $region19: #{tpu_custom_call.1} parent=5 // pred_region
        // Predicated region
        $region21: #{tpu_custom_call.1} parent=19 // pred_check
          %p118 = pneg %p56
        $region22: #{tpu_custom_call.1} parent=19 // pred_check_branch
          %120 = sbr.rel (%p118) target = $region24
        $region23: #{tpu_custom_call.1} parent=19 // pred_region
          %s121 = sand.u32 %s46, 1
          %s122 = scalar_lea.sflag [#allocation3], %s121
          %s123 = sand.u32 %s46, 1
          %s124 = smul.addr %s123, 16
          %s125 = scalar_lea.vmem [#allocation6], %s124
          %s127 = ssub.s32 256, 256
          %128 = vsyncadd %s122, %s127
          %s129 = smul.addr %s15, 2
          %s130 = smul.addr %s129, 128
          %s131 = scalar_lea.hbm %s1, %s130
          %s133 = sshll.u32 %s125, 4
          %s134 = int_to_ptr.vmem [resolvable:$true] %s133
          %136 = dma.hbm_to_vmem [thread:$0]  %s131, 256, %s134, %s122
        $region24: #{tpu_custom_call.1} parent=19 // pred_fallthru
          _
      $region20: #{tpu_custom_call.1} parent=5 // pred_fallthru
        _
      %p137 = scmp.le.s32.totalorder 1, %s15
      %p138 = scmp.lt.s32.totalorder %s15, 3
      %p139 = pnand %p137, %p138
      %p140 = pneg %p139
      // Predicated region
      $region25: #{tpu_custom_call.1} parent=5 // pred_check
        _
      $region26: #{tpu_custom_call.1} parent=5 // pred_check_branch
        %142 = sbr.rel (%p139) target = $region28
      $region27: #{tpu_custom_call.1} parent=5 // pred_region
        %s143 = ssub.s32 %s15, 1
        // Predicated region
        $region29: #{tpu_custom_call.1} parent=27 // pred_check
          %p144 = pneg %p36
        $region30: #{tpu_custom_call.1} parent=27 // pred_check_branch
          %146 = sbr.rel (%p144) target = $region32
        $region31: #{tpu_custom_call.1} parent=27 // pred_region
          %147 = dma.done [#allocation5], 16
        $region32: #{tpu_custom_call.1} parent=27 // pred_fallthru
          _
        %s148 = sand.u32 %s49, 1
        %s149 = scalar_lea.sflag [#allocation3], %s148
        %s150 = sand.u32 %s49, 1
        %s151 = smul.addr %s150, 16
        %s152 = scalar_lea.vmem [#allocation6], %s151
        // Predicated region
        $region33: #{tpu_custom_call.1} parent=27 // pred_check
          %p153 = pneg %p62
        $region34: #{tpu_custom_call.1} parent=27 // pred_check_branch
          %155 = sbr.rel (%p153) target = $region36
        $region35: #{tpu_custom_call.1} parent=27 // pred_region
          %156 = dma.done %s149, 256
        $region36: #{tpu_custom_call.1} parent=27 // pred_fallthru
          _
        %157 = sfence
        %p158 = pneg %p36
        %p159 = pneg %p33
        %s160 = sand.u32 %s49, 1
        %s161 = scalar_lea.sflag [#allocation3], %s160
        %s162 = sand.u32 %s49, 1
        %s163 = smul.addr %s162, 16
        %s164 = scalar_lea.vmem [#allocation6], %s163
        %p165 = pneg %p62
        %p166 = pneg %p59
        %p167 = pneg %p88
        %p168 = pneg %p85
        %s169 = sand.u32 %s75, 1
        %s170 = scalar_lea.sflag [#allocation4], %s169
        %s171 = sand.u32 %s75, 1
        %s172 = smul.addr %s171, 16
        %s173 = scalar_lea.vmem [#allocation7], %s172
        %v174 = vld [vmem:[%s152] sm:$0xff]
        %v175 = vld [vmem:[%s152 + $0x8] sm:$0xff]
        %v176 = vadd.f32 %v174, %v175
        %177 = vadd.xlane.f32.xlu0 %v176
        %v178 = vpop.xlane.xlu0 %177
        %s179 = sld [smem:[#allocation2 + $0x6]]
        %v180 = vstv %s179
        %v181 = vmul.f32 %v178, %v180
        %s182 = sld [smem:[#allocation2]]
        %s183 = sld [smem:[#allocation2 + $0x1]]
        %s184 = sld [smem:[#allocation2 + $0x2]]
        %v185 = vrot.slane %v181, 7
        %v186 = vrot.slane %v181, 1
        %v187 = vstv %s182
        %v188 = vmul.f32 %v187, %v185
        %v189 = vstv %s183
        %v190 = vmul.f32 %v189, %v181
        %v191 = vadd.f32 %v188, %v190
        %v192 = vstv %s184
        %v193 = vmul.f32 %v192, %v186
        %v194 = vadd.f32 %v191, %v193
        %v195 = vxor.u32 %v194, 2147483648
        %v196 = vmul.f32 %v195, 1.442695
        %v197 = vpow.pop %v196
        %v198 = vadd.f32 %v197, 1.0
        %v199 = vrcp.pop %v198
        %v200 = vmul.f32 1.0, %v199
        %v201 = vmul.f32 %v194, %v200
        %s202 = sld [smem:[#allocation2 + $0x3]]
        %s203 = sld [smem:[#allocation2 + $0x4]]
        %s204 = sld [smem:[#allocation2 + $0x5]]
        %v205 = vrot.slane %v201, 6
        %v206 = vrot.slane %v201, 2
        %v207 = vstv %s202
        %v208 = vmul.f32 %v207, %v205
        %v209 = vstv %s203
        %v210 = vmul.f32 %v209, %v201
        %v211 = vadd.f32 %v208, %v210
        %v212 = vstv %s204
        %v213 = vmul.f32 %v212, %v206
        %v214 = vadd.f32 %v211, %v213
        %v215 = vxor.u32 %v214, 2147483648
        %v216 = vmul.f32 %v215, 1.442695
        %v217 = vpow.pop %v216
        %v218 = vadd.f32 %v217, 1.0
        %v219 = vrcp.pop %v218
        %v220 = vmul.f32 1.0, %v219
        %222 = vset.pattern.permute.xlu0 0
        %223 = vperm.xlu0 %222, %v220
        %v224 = vpop.permute.xlu0 %223
        %v226 = vmul.f32 %v174, %v224
        %v227 = vmul.f32 %v175, %v224
        %228 = vst [vmem:[%s173] sm:$0xff] %v226
        %229 = vst [vmem:[%s173 + $0x8] sm:$0xff] %v227
        %s230 = sand.u32 %s75, 1
        %s231 = scalar_lea.sflag [#allocation4], %s230
        %s232 = sand.u32 %s75, 1
        %s233 = smul.addr %s232, 16
        %s234 = scalar_lea.vmem [#allocation7], %s233
        // Predicated region
        $region37: #{tpu_custom_call.1} parent=27 // pred_check
          %p235 = pneg %p85
        $region38: #{tpu_custom_call.1} parent=27 // pred_check_branch
          %237 = sbr.rel (%p235) target = $region40
        $region39: #{tpu_custom_call.1} parent=27 // pred_region
          %s239 = ssub.s32 256, 256
          %240 = vsyncadd %s231, %s239
          %s241 = smul.addr %s20, 2
          %s242 = smul.addr %s241, 128
          %s243 = scalar_lea.hbm %s2, %s242
          %s245 = sshll.u32 %s234, 4
          %s246 = int_to_ptr.vmem [resolvable:$true] %s245
          %248 = dma.vmem_to_hbm [thread:$0]  %s246, 256, %s243, %s231
        $region40: #{tpu_custom_call.1} parent=27 // pred_fallthru
          _
      $region28: #{tpu_custom_call.1} parent=5 // pred_fallthru
        _
      %p249 = scmp.le.s32.totalorder 2, %s15
      // Predicated region
      $region41: #{tpu_custom_call.1} parent=5 // pred_check
        %p250 = pneg %p249
      $region42: #{tpu_custom_call.1} parent=5 // pred_check_branch
        %252 = sbr.rel (%p250) target = $region44
      $region43: #{tpu_custom_call.1} parent=5 // pred_region
        %s253 = ssub.s32 %s15, 2
        // Predicated region
        $region45: #{tpu_custom_call.1} parent=43 // pred_check
          %p254 = pneg %p91
        $region46: #{tpu_custom_call.1} parent=43 // pred_check_branch
          %256 = sbr.rel (%p254) target = $region48
        $region47: #{tpu_custom_call.1} parent=43 // pred_region
          %s257 = sand.u32 %s76, 1
          %s258 = scalar_lea.sflag [#allocation4], %s257
          %s259 = sand.u32 %s76, 1
          %s260 = smul.addr %s259, 16
          %s261 = scalar_lea.vmem [#allocation7], %s260
          %262 = dma.done %s258, 256
        $region48: #{tpu_custom_call.1} parent=43 // pred_fallthru
          _
      $region44: #{tpu_custom_call.1} parent=5 // pred_fallthru
        _
    $region6: #{tpu_custom_call.1} parent=1 // loop_footer
      %s19 = sadd.s32 1, %s15
    $region7: #{tpu_custom_call.1} parent=1 // loop_footer_branch
      %14 = sbr.rel target = $region3
    $region8: #{tpu_custom_call.1} parent=1 // loop_exit
      _
    %263 = vsyncpa [#allocation3], 1
    %s264 = scalar_lea.sflag [#allocation3], 1
    %265 = vsyncpa %s264, 1
    %266 = vsyncpa [#allocation4], 1
    %s267 = scalar_lea.sflag [#allocation4], 1
    %268 = vsyncpa %s267, 1
    %269 = vsyncpa [#allocation5], 1
    %s270 = scalar_lea.sflag [#allocation5], 1
    %271 = vsyncpa %s270, 1

</llo_original>
